<compile_context>
chip_gen: v6e
topology: v6e:2x2x1
jax: 0.10.0
libtpu: 0.0.40
codegen_flags: <defaults>
</compile_context>

<pallas_src>
import jax
import jax.numpy as jnp
from jax import lax
from jax.experimental import pallas as pl
from jax.experimental.pallas import tpu as pltpu


# ---------------------------------------------------------------------------
# VMEM budget
# ---------------------------------------------------------------------------
def _vmem_budget_bytes():
    """~75% of physical VMEM (headroom for Mosaic internal scratch / metadata)."""
    try:
        cap = int(pltpu.get_tpu_info().vmem_capacity_bytes)
    except Exception:
        cap = 64 * 1024 * 1024  # v7x physical VMEM (smallest of v5e/v6e/v7x)
    return (cap * 3) // 4


# ---------------------------------------------------------------------------
# Kernels
# ---------------------------------------------------------------------------
def _make_vmem_reorder_kernel(rows_per_step):
    """Kernel for the coalesced path.

    perm_ref : SMEM (N,) int32   (scalar prefetch)
    x_ref    : VMEM (N, Dp)      (whole input, fetched once by the pipeline)
    o_ref    : VMEM (G, Dp)      (output row group for this grid step)

    rows_per_step: static int when every grid step handles exactly that many
    rows (n % group == 0) -> static loop bound (unrolled when short); else
    None -> runtime bound min(G, N - base).
    """
    static_rows = rows_per_step

    def kernel(perm_ref, x_ref, o_ref):
        group = o_ref.shape[0]
        base = pl.program_id(0) * group
        if static_rows is not None:
            upper = static_rows
            unroll = static_rows <= 32
        else:
            upper = jnp.minimum(group, x_ref.shape[0] - base)
            unroll = False

        def body(j, carry):
            src = perm_ref[base + j]
            # In-VMEM row copy: dynamic sublane slice read + dynamic store.
            o_ref[pl.ds(j, 1), :] = x_ref[pl.ds(src, 1), :]
            return carry

        lax.fori_loop(0, upper, body, 0, unroll=unroll)
        # Rows >= upper of a partial final block hold stale VMEM; Pallas masks
        # out-of-range rows of boundary blocks on writeback, so they never
        # reach HBM.

    return kernel


def _row_copy_kernel(perm_ref, x_ref, o_ref):
    """Kernel for the gather path: the data-dependent index_map already picked
    x[perm[i]] as the input block; just forward it to the output block."""
    del perm_ref
    o_ref[...] = x_ref[...]


# ---------------------------------------------------------------------------
# Wrapper
# ---------------------------------------------------------------------------
def shuffle_list_stacked(x_stacked, perm, *, force_path=None):
    """Gather x_stacked[perm] along axis 0 with a Pallas kernel.

    x_stacked: (N, ...) stacked list elements
    perm:      (N,) int32 permutation of range(N)
    force_path: None (auto), "vmem", or "gather" (testing / tuning hook)
    """
    n = int(x_stacked.shape[0])
    orig_shape = x_stacked.shape
    d = 1
    for s in orig_shape[1:]:
        d *= int(s)
    if n == 0 or d == 0:
        return x_stacked

    perm = perm.astype(jnp.int32)
    x2d = x_stacked.reshape(n, d)  # contiguous -> free reshape
    itemsize = int(x2d.dtype.itemsize)

    # Lane-dense rows: pad the flattened row to a multiple of 128 only when
    # needed (typical crop sizes are already 128-dense, so this is a no-op).
    dp = d
    if d % 128 != 0:
        dp = ((d + 127) // 128) * 128
        x2d = jnp.pad(x2d, ((0, 0), (0, dp - d)))

    row_bytes = dp * itemsize
    total_bytes = n * row_bytes

    budget = _vmem_budget_bytes()
    # Budget plan: at most 4 live buffers (2 in + 2 out) + one buffer of slack.
    use_vmem_path = 5 * total_bytes <= budget
    if force_path == "vmem":
        use_vmem_path = True
    elif force_path == "gather":
        use_vmem_path = False

    cost = pl.CostEstimate(flops=0, transcendentals=0,
                           bytes_accessed=2 * n * row_bytes)

    if use_vmem_path:
        # ---------------- coalesced in-VMEM reorder ----------------
        if n >= 16:
            # ~half the rows per step, rounded up to a sublane-friendly
            # multiple of 8 -> >=2 grid steps so both v7x TCs get work.
            group = 8 * pl.cdiv(pl.cdiv(n, 2), 8)
        else:
            group = n
        num_groups = pl.cdiv(n, group)
        rows_static = group if (n % group == 0) else None

        grid_spec = pltpu.PrefetchScalarGridSpec(
            num_scalar_prefetch=1,                       # perm lands in SMEM
            grid=(num_groups,),
            in_specs=[
                # Whole input as one block; constant index -> fetched once.
                pl.BlockSpec((n, dp), lambda i, perm_ref: (0, 0)),
            ],
            out_specs=pl.BlockSpec((group, dp), lambda i, perm_ref: (i, 0)),
        )
        out2d = pl.pallas_call(
            _make_vmem_reorder_kernel(rows_static),
            out_shape=jax.ShapeDtypeStruct((n, dp), x2d.dtype),
            grid_spec=grid_spec,
            compiler_params=pltpu.CompilerParams(
                dimension_semantics=("parallel",),
                vmem_limit_bytes=budget,
            ),
            cost_estimate=cost,
        )(perm, x2d)
    else:
        # ---------------- per-row (D-tiled) DMA gather ----------------
        tile_target_bytes = max(128 * itemsize, budget // 5)
        nd_tiles = max(1, pl.cdiv(row_bytes, tile_target_bytes))
        d_tile = 128 * pl.cdiv(pl.cdiv(dp, nd_tiles), 128)
        d_tile = min(d_tile, dp)
        nd_tiles = pl.cdiv(dp, d_tile)

        grid_spec = pltpu.PrefetchScalarGridSpec(
            num_scalar_prefetch=1,
            grid=(n, nd_tiles),
            in_specs=[
                # Data-dependent gather: the pipeline DMAs row perm[i], tile j.
                pl.BlockSpec((1, d_tile),
                             lambda i, j, perm_ref: (perm_ref[i], j)),
            ],
            out_specs=pl.BlockSpec((1, d_tile), lambda i, j, perm_ref: (i, j)),
        )
        out2d = pl.pallas_call(
            _row_copy_kernel,
            out_shape=jax.ShapeDtypeStruct((n, dp), x2d.dtype),
            grid_spec=grid_spec,
            compiler_params=pltpu.CompilerParams(
                dimension_semantics=("parallel", "arbitrary"),
                vmem_limit_bytes=budget,
            ),
            cost_estimate=cost,
        )(perm, x2d)

    if dp != d:
        out2d = out2d[:, :d]
    return out2d.reshape(orig_shape)


def shuffle_list(xs, key):
    """Mirror of ShuffleList.forward on a python list of same-shape arrays.
    For performance, keep the crops stacked and call shuffle_list_stacked
    directly (avoids the stack / per-element slice HBM passes)."""
    # TODO(synk): torch.randperm is host-side RNG glue; drawn with jax.random here.
    x_stacked = jnp.stack(xs, axis=0)
    perm = jax.random.permutation(key, len(xs)).astype(jnp.int32)
    out = shuffle_list_stacked(x_stacked, perm)
    return [out[i] for i in range(len(xs))], perm


if __name__ == "__main__":
    key = jax.random.PRNGKey(0)
    k_data, k_perm = jax.random.split(key)

    # "List" of 8 temporal crops, each (C=4, H=16, W=16), kept stacked.
    N, C, H, W = 8, 4, 16, 16
    x_stacked = jax.random.normal(k_data, (N, C, H, W), dtype=jnp.float32)
    perm = jax.random.permutation(k_perm, N).astype(jnp.int32)
    ref = x_stacked[perm]

    # Default (coalesced in-VMEM) path.
    out = shuffle_list_stacked(x_stacked, perm)
    jax.block_until_ready(out)
    assert out.shape == (N, C, H, W)
    assert jnp.array_equal(out, ref), "vmem-path output mismatch vs reference"

    # Large-element path exercised at small shape for coverage.
    out_g = shuffle_list_stacked(x_stacked, perm, force_path="gather")
    jax.block_until_ready(out_g)
    assert jnp.array_equal(out_g, ref), "gather-path output mismatch vs reference"

    # List-API wrapper (module-level semantics).
    xs = [x_stacked[i] for i in range(N)]
    new_xs, used_perm = shuffle_list(xs, k_perm)
    jax.block_until_ready(new_xs[0])
    for i in range(N):
        assert jnp.array_equal(new_xs[i], x_stacked[int(used_perm[i])])

    print("KERNEL_OK")
</pallas_src>

<mosaic_0001>
module attributes {stable_mosaic.version = 11 : i64} {
  func.func @kernel(%arg0: i32, %arg1: memref<8xi32, #tpu.memory_space<smem>>, %arg2: memref<8x1024xf32, #tpu.memory_space<vmem>>, %arg3: memref<8x1024xf32, #tpu.memory_space<vmem>>) attributes {dimension_semantics = [#tpu.dimension_semantics<parallel>], iteration_bounds = array<i64: 1>, scalar_prefetch = 1 : i64, scratch_operands = 0 : i64, tpu.core_type = #tpu.core_type<tc>, window_params = [{pipeline_mode = #tpu.pipeline_mode<synchronous>, transform_indices = @transform_0, window_bounds = array<i64: 8, 1024>}, {transform_indices = @transform_1, window_bounds = array<i64: 8, 1024>}]} {
    %c8_i32 = arith.constant 8 : i32
    %0 = arith.muli %arg0, %c8_i32 : i32
    %c0_i32 = arith.constant 0 : i32
    %1 = arith.addi %0, %c0_i32 : i32
    %2 = arith.index_cast %1 : i32 to index
    %3 = memref.load %arg1[%2] : memref<8xi32, #tpu.memory_space<smem>>
    %4 = arith.index_cast %3 : i32 to index
    %c0 = arith.constant 0 : index
    %5 = vector.load %arg2[%4, %c0] : memref<8x1024xf32, #tpu.memory_space<vmem>>, vector<1x1024xf32>
    %6 = arith.index_cast %c0_i32 : i32 to index
    %c0_0 = arith.constant 0 : index
    %7 = vector.load %arg3[%6, %c0_0] : memref<8x1024xf32, #tpu.memory_space<vmem>>, vector<1x1024xf32>
    tpu.vector_store %arg3[%6, %c0_0], %5 {strides = array<i32>} : memref<8x1024xf32, #tpu.memory_space<vmem>>, vector<1x1024xf32>,
    %c1_i32 = arith.constant 1 : i32
    %8 = arith.addi %0, %c1_i32 : i32
    %9 = arith.index_cast %8 : i32 to index
    %10 = memref.load %arg1[%9] : memref<8xi32, #tpu.memory_space<smem>>
    %11 = arith.index_cast %10 : i32 to index
    %c0_1 = arith.constant 0 : index
    %12 = vector.load %arg2[%11, %c0_1] : memref<8x1024xf32, #tpu.memory_space<vmem>>, vector<1x1024xf32>
    %13 = arith.index_cast %c1_i32 : i32 to index
    %c0_2 = arith.constant 0 : index
    %14 = vector.load %arg3[%13, %c0_2] : memref<8x1024xf32, #tpu.memory_space<vmem>>, vector<1x1024xf32>
    tpu.vector_store %arg3[%13, %c0_2], %12 {strides = array<i32>} : memref<8x1024xf32, #tpu.memory_space<vmem>>, vector<1x1024xf32>,
    %c2_i32 = arith.constant 2 : i32
    %15 = arith.addi %0, %c2_i32 : i32
    %16 = arith.index_cast %15 : i32 to index
    %17 = memref.load %arg1[%16] : memref<8xi32, #tpu.memory_space<smem>>
    %18 = arith.index_cast %17 : i32 to index
    %c0_3 = arith.constant 0 : index
    %19 = vector.load %arg2[%18, %c0_3] : memref<8x1024xf32, #tpu.memory_space<vmem>>, vector<1x1024xf32>
    %20 = arith.index_cast %c2_i32 : i32 to index
    %c0_4 = arith.constant 0 : index
    %21 = vector.load %arg3[%20, %c0_4] : memref<8x1024xf32, #tpu.memory_space<vmem>>, vector<1x1024xf32>
    tpu.vector_store %arg3[%20, %c0_4], %19 {strides = array<i32>} : memref<8x1024xf32, #tpu.memory_space<vmem>>, vector<1x1024xf32>,
    %c3_i32 = arith.constant 3 : i32
    %22 = arith.addi %0, %c3_i32 : i32
    %23 = arith.index_cast %22 : i32 to index
    %24 = memref.load %arg1[%23] : memref<8xi32, #tpu.memory_space<smem>>
    %25 = arith.index_cast %24 : i32 to index
    %c0_5 = arith.constant 0 : index
    %26 = vector.load %arg2[%25, %c0_5] : memref<8x1024xf32, #tpu.memory_space<vmem>>, vector<1x1024xf32>
    %27 = arith.index_cast %c3_i32 : i32 to index
    %c0_6 = arith.constant 0 : index
    %28 = vector.load %arg3[%27, %c0_6] : memref<8x1024xf32, #tpu.memory_space<vmem>>, vector<1x1024xf32>
    tpu.vector_store %arg3[%27, %c0_6], %26 {strides = array<i32>} : memref<8x1024xf32, #tpu.memory_space<vmem>>, vector<1x1024xf32>,
    %c4_i32 = arith.constant 4 : i32
    %29 = arith.addi %0, %c4_i32 : i32
    %30 = arith.index_cast %29 : i32 to index
    %31 = memref.load %arg1[%30] : memref<8xi32, #tpu.memory_space<smem>>
    %32 = arith.index_cast %31 : i32 to index
    %c0_7 = arith.constant 0 : index
    %33 = vector.load %arg2[%32, %c0_7] : memref<8x1024xf32, #tpu.memory_space<vmem>>, vector<1x1024xf32>
    %34 = arith.index_cast %c4_i32 : i32 to index
    %c0_8 = arith.constant 0 : index
    %35 = vector.load %arg3[%34, %c0_8] : memref<8x1024xf32, #tpu.memory_space<vmem>>, vector<1x1024xf32>
    tpu.vector_store %arg3[%34, %c0_8], %33 {strides = array<i32>} : memref<8x1024xf32, #tpu.memory_space<vmem>>, vector<1x1024xf32>,
    %c5_i32 = arith.constant 5 : i32
    %36 = arith.addi %0, %c5_i32 : i32
    %37 = arith.index_cast %36 : i32 to index
    %38 = memref.load %arg1[%37] : memref<8xi32, #tpu.memory_space<smem>>
    %39 = arith.index_cast %38 : i32 to index
    %c0_9 = arith.constant 0 : index
    %40 = vector.load %arg2[%39, %c0_9] : memref<8x1024xf32, #tpu.memory_space<vmem>>, vector<1x1024xf32>
    %41 = arith.index_cast %c5_i32 : i32 to index
    %c0_10 = arith.constant 0 : index
    %42 = vector.load %arg3[%41, %c0_10] : memref<8x1024xf32, #tpu.memory_space<vmem>>, vector<1x1024xf32>
    tpu.vector_store %arg3[%41, %c0_10], %40 {strides = array<i32>} : memref<8x1024xf32, #tpu.memory_space<vmem>>, vector<1x1024xf32>,
    %c6_i32 = arith.constant 6 : i32
    %43 = arith.addi %0, %c6_i32 : i32
    %44 = arith.index_cast %43 : i32 to index
    %45 = memref.load %arg1[%44] : memref<8xi32, #tpu.memory_space<smem>>
    %46 = arith.index_cast %45 : i32 to index
    %c0_11 = arith.constant 0 : index
    %47 = vector.load %arg2[%46, %c0_11] : memref<8x1024xf32, #tpu.memory_space<vmem>>, vector<1x1024xf32>
    %48 = arith.index_cast %c6_i32 : i32 to index
    %c0_12 = arith.constant 0 : index
    %49 = vector.load %arg3[%48, %c0_12] : memref<8x1024xf32, #tpu.memory_space<vmem>>, vector<1x1024xf32>
    tpu.vector_store %arg3[%48, %c0_12], %47 {strides = array<i32>} : memref<8x1024xf32, #tpu.memory_space<vmem>>, vector<1x1024xf32>,
    %c7_i32 = arith.constant 7 : i32
    %50 = arith.addi %0, %c7_i32 : i32
    %51 = arith.index_cast %50 : i32 to index
    %52 = memref.load %arg1[%51] : memref<8xi32, #tpu.memory_space<smem>>
    %53 = arith.index_cast %52 : i32 to index
    %c0_13 = arith.constant 0 : index
    %54 = vector.load %arg2[%53, %c0_13] : memref<8x1024xf32, #tpu.memory_space<vmem>>, vector<1x1024xf32>
    %55 = arith.index_cast %c7_i32 : i32 to index
    %c0_14 = arith.constant 0 : index
    %56 = vector.load %arg3[%55, %c0_14] : memref<8x1024xf32, #tpu.memory_space<vmem>>, vector<1x1024xf32>
    tpu.vector_store %arg3[%55, %c0_14], %54 {strides = array<i32>} : memref<8x1024xf32, #tpu.memory_space<vmem>>, vector<1x1024xf32>,
    %c8_i32_15 = arith.constant 8 : i32
    return
  }
  func.func @transform_0(%arg0: i32, %arg1: memref<8xi32, #tpu.memory_space<smem>>) -> (i32, i32) {
    %c0_i32 = arith.constant 0 : i32
    %c0_i32_0 = arith.constant 0 : i32
    %c0_i32_1 = arith.constant 0 : i32
    return %c0_i32, %c0_i32_0 : i32, i32
  }
  func.func @transform_1(%arg0: i32, %arg1: memref<8xi32, #tpu.memory_space<smem>>) -> (i32, i32) {
    %c0_i32 = arith.constant 0 : i32
    %c0_i32_0 = arith.constant 0 : i32
    return %arg0, %c0_i32 : i32, i32
  }
}

</mosaic_0001>

<llo_original>
// kernel: tpu_custom_call.1
$region0: #{tpu_custom_call.1}
  #allocation0 [shape = 'u32[]', space=smem, size = 0x4, offset = 0x4, fixed_abs, tag = 'smem constant byte address 0x4 - core index']
  #allocation1 [shape = 'u32[144,128]{1,0:T(1,128)}', space=vmem, size = 0x12000, scoped, tag = 'internal scratch']
  #allocation2 [shape = 's32[1]{0}', space=sflag, size = 0x4, scoped, tag = 'scoped memory for tpu_custom_call.1']
  #allocation3 [shape = 'u8[512]{0}', space=smem, size = 0x200, scoped, tag = 'prefetched SMEM operand 0']
  %s0 = inlined_call_operand.hbm [shape: s32[8], index: 0, kind: input, shape index: {}]
  %s1 = inlined_call_operand.hbm [shape: f32[8,1024], index: 1, kind: input, shape index: {}]
  %s2 = inlined_call_operand.hbm [shape: f32[8,1024], index: 2, kind: output, shape index: {}]
  %s3 = sld [smem:[#allocation0]]
  $region18: #{tpu_custom_call.1} parent=0
    _
  %s5 = ssub.s32 1, %s3
  %s6 = scalar_select 0, %s5, %s3
  %8 = dma.hbm_to_smem %s0, 16, [#allocation3], [#allocation2]
  %9 = dma.done [#allocation2], 16
  %10 = sfence
  $region1: #{tpu_custom_call.1} parent=0
    #allocation4 [shape = 'u8[32768]{0}', space=vmem, size = 0x8000, scoped, tag = 'input window, operand 1, single buffered']
    #allocation5 [shape = 's32[1]{0}', space=sflag, size = 0x4, scoped, tag = 'scoped memory for tpu_custom_call.1']
    #allocation6 [shape = 's32[1]{0}', space=sflag, size = 0x4, scoped, tag = 'scoped memory for tpu_custom_call.1']
    #allocation7 [shape = 'u8[32768]{0}', space=vmem, size = 0x8000, scoped, tag = 'output window, operand 0, single buffered']
    %11 = vsyncpa [#allocation5], 0
    %12 = vsyncpa [#allocation6], 0
    // Predicated region
    $region2: #{tpu_custom_call.1} parent=1 // pred_check
      _
    $region3: #{tpu_custom_call.1} parent=1 // pred_check_branch
      %14 = sbr.rel (0) target = $region5
    $region4: #{tpu_custom_call.1} parent=1 // pred_region
      %s16 = ssub.s32 1024, 1024
      %17 = vsyncadd [#allocation5], %s16
      %s19 = sshll.u32 [#allocation4], 4
      %s20 = int_to_ptr.vmem [resolvable:$true] %s19
      %22 = dma.hbm_to_vmem [thread:$0]  %s1, 1024, %s20, [#allocation5]
    $region5: #{tpu_custom_call.1} parent=1 // pred_fallthru
      _
    // Predicated region
    $region6: #{tpu_custom_call.1} parent=1 // pred_check
      _
    $region7: #{tpu_custom_call.1} parent=1 // pred_check_branch
      %24 = sbr.rel (0) target = $region9
    $region8: #{tpu_custom_call.1} parent=1 // pred_region
      %25 = dma.done [#allocation5], 1024
    $region9: #{tpu_custom_call.1} parent=1 // pred_fallthru
      _
    %s26 = smul.u32 0, 8
    %s27 = sld [smem:[#allocation3 + %s26]]
    %s28 = sshra.s32 %s27, 3
    %s29 = sand.u32 %s27, 7
    %s30 = sshra.s32 %s27, 3
    %s31 = sand.u32 %s27, 7
    %s32 = smul.u32 %s28, 8
    %s33 = smul.u32 %s32, 8
    %s34 = sadd.s32 %s33, %s31
    %s35 = scalar_lea.vmem [#allocation4], %s34
    %v36 = vld [vmem:[%s35] ss:$8 sm:$0xf]
    %v37 = vld [vmem:[%s35] ss:$8 sm:$0xf0]
    %v38 = vor.u32 %v36, %v37
    %39 = vst [vmem:[#allocation7] ss:$8 sm:$0xf] %v38
    %40 = vst [vmem:[#allocation7] ss:$8 sm:$0xf0] %v38
    %s41 = sadd.s32 %s26, 1
    %s42 = sld [smem:[#allocation3 + %s41]]
    %s43 = sshra.s32 %s42, 3
    %s44 = sand.u32 %s42, 7
    %s45 = sshra.s32 %s42, 3
    %s46 = sand.u32 %s42, 7
    %s47 = smul.u32 %s43, 8
    %s48 = smul.u32 %s47, 8
    %s49 = sadd.s32 %s48, %s46
    %s50 = scalar_lea.vmem [#allocation4], %s49
    %v51 = vld [vmem:[%s50] ss:$8 sm:$0xf]
    %v52 = vld [vmem:[%s50] ss:$8 sm:$0xf0]
    %v53 = vor.u32 %v51, %v52
    %s54 = scalar_lea.vmem [#allocation7], 1
    %55 = vst [vmem:[%s54] ss:$8 sm:$0xf] %v53
    %56 = vst [vmem:[%s54] ss:$8 sm:$0xf0] %v53
    %s57 = sadd.s32 %s26, 2
    %s58 = sld [smem:[#allocation3 + %s57]]
    %s59 = sshra.s32 %s58, 3
    %s60 = sand.u32 %s58, 7
    %s61 = sshra.s32 %s58, 3
    %s62 = sand.u32 %s58, 7
    %s63 = smul.u32 %s59, 8
    %s64 = smul.u32 %s63, 8
    %s65 = sadd.s32 %s64, %s62
    %s66 = scalar_lea.vmem [#allocation4], %s65
    %v67 = vld [vmem:[%s66] ss:$8 sm:$0xf]
    %v68 = vld [vmem:[%s66] ss:$8 sm:$0xf0]
    %v69 = vor.u32 %v67, %v68
    %s70 = scalar_lea.vmem [#allocation7], 2
    %71 = vst [vmem:[%s70] ss:$8 sm:$0xf] %v69
    %72 = vst [vmem:[%s70] ss:$8 sm:$0xf0] %v69
    %s73 = sadd.s32 %s26, 3
    %s74 = sld [smem:[#allocation3 + %s73]]
    %s75 = sshra.s32 %s74, 3
    %s76 = sand.u32 %s74, 7
    %s77 = sshra.s32 %s74, 3
    %s78 = sand.u32 %s74, 7
    %s79 = smul.u32 %s75, 8
    %s80 = smul.u32 %s79, 8
    %s81 = sadd.s32 %s80, %s78
    %s82 = scalar_lea.vmem [#allocation4], %s81
    %v83 = vld [vmem:[%s82] ss:$8 sm:$0xf]
    %v84 = vld [vmem:[%s82] ss:$8 sm:$0xf0]
    %v85 = vor.u32 %v83, %v84
    %s86 = scalar_lea.vmem [#allocation7], 3
    %87 = vst [vmem:[%s86] ss:$8 sm:$0xf] %v85
    %88 = vst [vmem:[%s86] ss:$8 sm:$0xf0] %v85
    %s89 = sadd.s32 %s26, 4
    %s90 = sld [smem:[#allocation3 + %s89]]
    %s91 = sshra.s32 %s90, 3
    %s92 = sand.u32 %s90, 7
    %s93 = sshra.s32 %s90, 3
    %s94 = sand.u32 %s90, 7
    %s95 = smul.u32 %s91, 8
    %s96 = smul.u32 %s95, 8
    %s97 = sadd.s32 %s96, %s94
    %s98 = scalar_lea.vmem [#allocation4], %s97
    %v99 = vld [vmem:[%s98] ss:$8 sm:$0xf]
    %v100 = vld [vmem:[%s98] ss:$8 sm:$0xf0]
    %v101 = vor.u32 %v99, %v100
    %s102 = scalar_lea.vmem [#allocation7], 4
    %103 = vst [vmem:[%s102] ss:$8 sm:$0xf] %v101
    %104 = vst [vmem:[%s102] ss:$8 sm:$0xf0] %v101
    %s105 = sadd.s32 %s26, 5
    %s106 = sld [smem:[#allocation3 + %s105]]
    %s107 = sshra.s32 %s106, 3
    %s108 = sand.u32 %s106, 7
    %s109 = sshra.s32 %s106, 3
    %s110 = sand.u32 %s106, 7
    %s111 = smul.u32 %s107, 8
    %s112 = smul.u32 %s111, 8
    %s113 = sadd.s32 %s112, %s110
    %s114 = scalar_lea.vmem [#allocation4], %s113
    %v115 = vld [vmem:[%s114] ss:$8 sm:$0xf]
    %v116 = vld [vmem:[%s114] ss:$8 sm:$0xf0]
    %v117 = vor.u32 %v115, %v116
    %s118 = scalar_lea.vmem [#allocation7], 5
    %119 = vst [vmem:[%s118] ss:$8 sm:$0xf] %v117
    %120 = vst [vmem:[%s118] ss:$8 sm:$0xf0] %v117
    %s121 = sadd.s32 %s26, 6
    %s122 = sld [smem:[#allocation3 + %s121]]
    %s123 = sshra.s32 %s122, 3
    %s124 = sand.u32 %s122, 7
    %s125 = sshra.s32 %s122, 3
    %s126 = sand.u32 %s122, 7
    %s127 = smul.u32 %s123, 8
    %s128 = smul.u32 %s127, 8
    %s129 = sadd.s32 %s128, %s126
    %s130 = scalar_lea.vmem [#allocation4], %s129
    %v131 = vld [vmem:[%s130] ss:$8 sm:$0xf]
    %v132 = vld [vmem:[%s130] ss:$8 sm:$0xf0]
    %v133 = vor.u32 %v131, %v132
    %s134 = scalar_lea.vmem [#allocation7], 6
    %135 = vst [vmem:[%s134] ss:$8 sm:$0xf] %v133
    %136 = vst [vmem:[%s134] ss:$8 sm:$0xf0] %v133
    %s137 = sadd.s32 %s26, 7
    %s138 = sld [smem:[#allocation3 + %s137]]
    %s139 = sshra.s32 %s138, 3
    %s140 = sand.u32 %s138, 7
    %s141 = sshra.s32 %s138, 3
    %s142 = sand.u32 %s138, 7
    %s143 = smul.u32 %s139, 8
    %s144 = smul.u32 %s143, 8
    %s145 = sadd.s32 %s144, %s142
    %s146 = scalar_lea.vmem [#allocation4], %s145
    %v147 = vld [vmem:[%s146] ss:$8 sm:$0xf]
    %v148 = vld [vmem:[%s146] ss:$8 sm:$0xf0]
    %v149 = vor.u32 %v147, %v148
    %s150 = scalar_lea.vmem [#allocation7], 7
    %151 = vst [vmem:[%s150] ss:$8 sm:$0xf] %v149
    %152 = vst [vmem:[%s150] ss:$8 sm:$0xf0] %v149
    // Predicated region
    $region10: #{tpu_custom_call.1} parent=1 // pred_check
      _
    $region11: #{tpu_custom_call.1} parent=1 // pred_check_branch
      %154 = sbr.rel (0) target = $region13
    $region12: #{tpu_custom_call.1} parent=1 // pred_region
      %s156 = ssub.s32 1024, 1024
      %157 = vsyncadd [#allocation6], %s156
      %s159 = sshll.u32 [#allocation7], 4
      %s160 = int_to_ptr.vmem [resolvable:$true] %s159
      %162 = dma.vmem_to_hbm [thread:$0]  %s160, 1024, %s2, [#allocation6]
    $region13: #{tpu_custom_call.1} parent=1 // pred_fallthru
      _
    // Predicated region
    $region14: #{tpu_custom_call.1} parent=1 // pred_check
      _
    $region15: #{tpu_custom_call.1} parent=1 // pred_check_branch
      %164 = sbr.rel (0) target = $region17
    $region16: #{tpu_custom_call.1} parent=1 // pred_region
      %165 = dma.done [#allocation6], 1024
    $region17: #{tpu_custom_call.1} parent=1 // pred_fallthru
      _
    %166 = vsyncpa [#allocation5], 1
    %167 = vsyncpa [#allocation6], 1

</llo_original>
